<compile_context>
chip_gen: v7x
topology: tpu7x:2x2x1
jax: 0.10.0
libtpu: 0.0.40
codegen_flags: <defaults>
</compile_context>

<pallas_src>
import math

import jax
import jax.numpy as jnp
from jax.experimental import pallas as pl
from jax.experimental.pallas import tpu as pltpu

_LANE = 128        # pad every feature dim to a multiple of this (lane-dense)
_SUBLANE = 8       # batch tiles must be a multiple of this
_NEG_SLOPE = 0.2   # matches nn.LeakyReLU(0.2) in AE_NN


def _round_up(x, m):
    return ((x + m - 1) // m) * m


def _make_fused_kernel(num_encoder, num_layers, compute_dtype):
    """Kernel running the full encoder+decoder stack on one (tm, feat) tile."""

    def kernel(x_ref, *refs):
        w_refs = refs[:num_layers]
        b_refs = refs[num_layers:2 * num_layers]
        h_ref = refs[2 * num_layers]
        xhat_ref = refs[2 * num_layers + 1]

        act = x_ref[...].astype(jnp.float32)
        for li in range(num_layers):                      # unrolled at trace time
            acc = jnp.dot(act.astype(compute_dtype), w_refs[li][...],
                          preferred_element_type=jnp.float32)
            acc = acc + b_refs[li][...]                   # bias + LeakyReLU in f32
            act = jnp.where(acc >= 0.0, acc, _NEG_SLOPE * acc)
            if li == num_encoder - 1:
                h_ref[...] = act.astype(h_ref.dtype)
        xhat_ref[...] = act.astype(xhat_ref.dtype)

    return kernel


def init_ae_nn_params(key, dim_input, dims_encoder, dims_decoder):
    """nn.Linear-style init (uniform +/- 1/sqrt(fan_in)).
    Weights stored transposed as (in, out) = PyTorch W.T, biases as (1, out)."""
    dims_en = [dim_input] + list(dims_encoder)
    dims_de = list(dims_decoder) + [dim_input]
    num_layer = len(dims_en) - 1

    def make_layer(k, d_in, d_out):
        kw, kb = jax.random.split(k)
        bound = 1.0 / math.sqrt(d_in)
        w = jax.random.uniform(kw, (d_in, d_out), jnp.float32, -bound, bound)
        b = jax.random.uniform(kb, (1, d_out), jnp.float32, -bound, bound)
        return w, b

    keys = jax.random.split(key, 2 * num_layer)
    encoder = [make_layer(keys[i], dims_en[i], dims_en[i + 1])
               for i in range(num_layer)]
    decoder = [make_layer(keys[num_layer + i], dims_de[i], dims_de[i + 1])
               for i in range(num_layer)]
    return {"encoder": encoder, "decoder": decoder}


def prepare_padded_params(params, compute_dtype=jnp.float32):
    """Zero-pad every feature dim up to a multiple of 128 (done once).
    Weights are stored in `compute_dtype` (f32 or bf16); biases stay f32."""
    layers = list(params["encoder"]) + list(params["decoder"])
    padded = []
    for w, b in layers:
        k, n = w.shape
        kp, np_ = _round_up(k, _LANE), _round_up(n, _LANE)
        wp = jnp.zeros((kp, np_), compute_dtype).at[:k, :n].set(
            w.astype(compute_dtype))
        bp = jnp.zeros((1, np_), jnp.float32).at[:, :n].set(b)
        padded.append((wp, bp))
    return padded


def ae_nn_forward(padded_layers, num_encoder, x, *, h_dim, tm=256,
                  compute_dtype=jnp.float32):
    """Fused AE_NN forward.  x: (M, dim_input) f32 -> (h, x_hat)."""
    M, D = x.shape
    num_layers = len(padded_layers)
    Dp = padded_layers[0][0].shape[0]                 # padded input feature dim
    Hp = padded_layers[num_encoder - 1][0].shape[1]   # padded bottleneck dim
    Op = padded_layers[-1][0].shape[1]                # padded output dim

    # One pad for the whole pass (batch to tile multiple, features to 128 lanes).
    tm_eff = min(tm, _round_up(M, _SUBLANE))
    Mp = _round_up(M, tm_eff)
    if (Mp, Dp) != (M, D):
        x = jnp.pad(x, ((0, Mp - M), (0, Dp - D)))

    ws = [w for w, _ in padded_layers]
    bs = [b for _, b in padded_layers]

    kernel = _make_fused_kernel(num_encoder, num_layers, compute_dtype)

    # Weights/biases: constant index_map -> resident across all batch tiles.
    w_specs = [pl.BlockSpec(w.shape, lambda i: (0, 0)) for w in ws]
    b_specs = [pl.BlockSpec(b.shape, lambda i: (0, 0)) for b in bs]

    h_p, xhat_p = pl.pallas_call(
        kernel,
        out_shape=(jax.ShapeDtypeStruct((Mp, Hp), jnp.float32),
                   jax.ShapeDtypeStruct((Mp, Op), jnp.float32)),
        grid_spec=pltpu.PrefetchScalarGridSpec(
            num_scalar_prefetch=0,
            grid=(Mp // tm_eff,),
            in_specs=[pl.BlockSpec((tm_eff, Dp), lambda i: (i, 0))]
                     + w_specs + b_specs,
            out_specs=[pl.BlockSpec((tm_eff, Hp), lambda i: (i, 0)),
                       pl.BlockSpec((tm_eff, Op), lambda i: (i, 0))],
        ),
        compiler_params=pltpu.CompilerParams(
            dimension_semantics=("parallel",),
            vmem_limit_bytes=32 * 1024 * 1024),  # portable to v7x's 64 MiB VMEM
    )(x, *ws, *bs)

    # Single slice at the end (padded rows/cols are garbage/zeros by design).
    h = h_p[:M, :h_dim]
    x_hat = xhat_p[:M, :D]
    return h, x_hat


def _reference_forward(params, x):
    def lrelu(v):
        return jnp.where(v >= 0.0, v, _NEG_SLOPE * v)
    for w, b in params["encoder"]:
        x = lrelu(x @ w + b)
    h = x
    for w, b in params["decoder"]:
        x = lrelu(x @ w + b)
    return h, x


if __name__ == "__main__":
    key = jax.random.PRNGKey(0)
    k_param, k_x = jax.random.split(key)

    batch = 10                 # non-multiple of 8 to exercise padding path
    dim_input = 32
    dims_encoder = [64, 16]
    dims_decoder = [16, 64]

    params = init_ae_nn_params(k_param, dim_input, dims_encoder, dims_decoder)
    x = jax.random.normal(k_x, (batch, dim_input), jnp.float32)

    num_encoder = len(dims_encoder)
    h_dim = dims_encoder[-1]

    # f32 path: must match the pure-JAX reference exactly (to fp tolerance).
    padded_f32 = prepare_padded_params(params, jnp.float32)
    h, x_hat = ae_nn_forward(padded_f32, num_encoder, x, h_dim=h_dim,
                             compute_dtype=jnp.float32)
    jax.block_until_ready((h, x_hat))

    h_ref, xhat_ref = _reference_forward(params, x)
    assert h.shape == (batch, h_dim)
    assert x_hat.shape == (batch, dim_input)
    assert jnp.allclose(h, h_ref, atol=1e-5, rtol=1e-5)
    assert jnp.allclose(x_hat, xhat_ref, atol=1e-5, rtol=1e-5)

    # bf16 weight/activation path (halves HBM traffic for large batches on
    # v6e/v7x); accumulation + epilogue stay f32.  Loose shape/finite check.
    padded_bf16 = prepare_padded_params(params, jnp.bfloat16)
    h16, xhat16 = ae_nn_forward(padded_bf16, num_encoder, x, h_dim=h_dim,
                                compute_dtype=jnp.bfloat16)
    jax.block_until_ready((h16, xhat16))
    assert h16.shape == (batch, h_dim) and xhat16.shape == (batch, dim_input)
    assert bool(jnp.all(jnp.isfinite(h16))) and bool(jnp.all(jnp.isfinite(xhat16)))

    print("KERNEL_OK")
</pallas_src>

<mosaic_0001>
module attributes {stable_mosaic.version = 11 : i64} {
  func.func @kernel(%arg0: i32, %arg1: memref<16x128xf32, #tpu.memory_space<vmem>>, %arg2: memref<128x128xf32, #tpu.memory_space<vmem>>, %arg3: memref<128x128xf32, #tpu.memory_space<vmem>>, %arg4: memref<128x128xf32, #tpu.memory_space<vmem>>, %arg5: memref<128x128xf32, #tpu.memory_space<vmem>>, %arg6: memref<1x128xf32, #tpu.memory_space<vmem>>, %arg7: memref<1x128xf32, #tpu.memory_space<vmem>>, %arg8: memref<1x128xf32, #tpu.memory_space<vmem>>, %arg9: memref<1x128xf32, #tpu.memory_space<vmem>>, %arg10: memref<16x128xf32, #tpu.memory_space<vmem>>, %arg11: memref<16x128xf32, #tpu.memory_space<vmem>>) attributes {dimension_semantics = [#tpu.dimension_semantics<parallel>], iteration_bounds = array<i64: 1>, scalar_prefetch = 0 : i64, scratch_operands = 0 : i64, tpu.core_type = #tpu.core_type<tc>, window_params = [{transform_indices = @transform_0, window_bounds = array<i64: 16, 128>}, {pipeline_mode = #tpu.pipeline_mode<synchronous>, transform_indices = @transform_1, window_bounds = array<i64: 128, 128>}, {pipeline_mode = #tpu.pipeline_mode<synchronous>, transform_indices = @transform_2, window_bounds = array<i64: 128, 128>}, {pipeline_mode = #tpu.pipeline_mode<synchronous>, transform_indices = @transform_3, window_bounds = array<i64: 128, 128>}, {pipeline_mode = #tpu.pipeline_mode<synchronous>, transform_indices = @transform_4, window_bounds = array<i64: 128, 128>}, {pipeline_mode = #tpu.pipeline_mode<synchronous>, transform_indices = @transform_5, window_bounds = array<i64: 1, 128>}, {pipeline_mode = #tpu.pipeline_mode<synchronous>, transform_indices = @transform_6, window_bounds = array<i64: 1, 128>}, {pipeline_mode = #tpu.pipeline_mode<synchronous>, transform_indices = @transform_7, window_bounds = array<i64: 1, 128>}, {pipeline_mode = #tpu.pipeline_mode<synchronous>, transform_indices = @transform_8, window_bounds = array<i64: 1, 128>}, {transform_indices = @transform_9, window_bounds = array<i64: 16, 128>}, {transform_indices = @transform_10, window_bounds = array<i64: 16, 128>}]} {
    %c0 = arith.constant 0 : index
    %c0_0 = arith.constant 0 : index
    %0 = vector.load %arg1[%c0, %c0_0] : memref<16x128xf32, #tpu.memory_space<vmem>>, vector<16x128xf32>
    %c0_1 = arith.constant 0 : index
    %c0_2 = arith.constant 0 : index
    %1 = vector.load %arg2[%c0_1, %c0_2] : memref<128x128xf32, #tpu.memory_space<vmem>>, vector<128x128xf32>
    %cst = arith.constant dense<0.000000e+00> : vector<16x128xf32>
    %2 = tpu.matmul %0, %1, %cst {dimension_numbers = #tpu.dot_dimension_numbers<[1], [0], [0], [1], [0, 0, 1, 1], [], []>} : vector<16x128xf32>, vector<128x128xf32>, vector<16x128xf32> -> vector<16x128xf32>
    %c0_3 = arith.constant 0 : index
    %c0_4 = arith.constant 0 : index
    %3 = vector.load %arg6[%c0_3, %c0_4] : memref<1x128xf32, #tpu.memory_space<vmem>>, vector<1x128xf32>
    %4 = vector.broadcast %3 : vector<1x128xf32> to vector<16x128xf32>
    %5 = arith.addf %2, %4 : vector<16x128xf32>
    %cst_5 = arith.constant 0.000000e+00 : f32
    %6 = vector.broadcast %cst_5 : f32 to vector<16x128xf32>
    %7 = arith.cmpf oge, %5, %6 : vector<16x128xf32>
    %cst_6 = arith.constant 2.000000e-01 : f32
    %8 = vector.broadcast %cst_6 : f32 to vector<16x128xf32>
    %9 = arith.mulf %8, %5 : vector<16x128xf32>
    %10 = arith.select %7, %5, %9 : vector<16x128xi1>, vector<16x128xf32>
    %c0_7 = arith.constant 0 : index
    %c0_8 = arith.constant 0 : index
    %11 = vector.load %arg3[%c0_7, %c0_8] : memref<128x128xf32, #tpu.memory_space<vmem>>, vector<128x128xf32>
    %cst_9 = arith.constant dense<0.000000e+00> : vector<16x128xf32>
    %12 = tpu.matmul %10, %11, %cst_9 {dimension_numbers = #tpu.dot_dimension_numbers<[1], [0], [0], [1], [0, 0, 1, 1], [], []>} : vector<16x128xf32>, vector<128x128xf32>, vector<16x128xf32> -> vector<16x128xf32>
    %c0_10 = arith.constant 0 : index
    %c0_11 = arith.constant 0 : index
    %13 = vector.load %arg7[%c0_10, %c0_11] : memref<1x128xf32, #tpu.memory_space<vmem>>, vector<1x128xf32>
    %14 = vector.broadcast %13 : vector<1x128xf32> to vector<16x128xf32>
    %15 = arith.addf %12, %14 : vector<16x128xf32>
    %cst_12 = arith.constant 0.000000e+00 : f32
    %16 = vector.broadcast %cst_12 : f32 to vector<16x128xf32>
    %17 = arith.cmpf oge, %15, %16 : vector<16x128xf32>
    %cst_13 = arith.constant 2.000000e-01 : f32
    %18 = vector.broadcast %cst_13 : f32 to vector<16x128xf32>
    %19 = arith.mulf %18, %15 : vector<16x128xf32>
    %20 = arith.select %17, %15, %19 : vector<16x128xi1>, vector<16x128xf32>
    %c0_14 = arith.constant 0 : index
    %c0_15 = arith.constant 0 : index
    %21 = vector.load %arg10[%c0_14, %c0_15] : memref<16x128xf32, #tpu.memory_space<vmem>>, vector<16x128xf32>
    tpu.vector_store %arg10[%c0_14, %c0_15], %20 {strides = array<i32>} : memref<16x128xf32, #tpu.memory_space<vmem>>, vector<16x128xf32>,
    %c0_16 = arith.constant 0 : index
    %c0_17 = arith.constant 0 : index
    %22 = vector.load %arg4[%c0_16, %c0_17] : memref<128x128xf32, #tpu.memory_space<vmem>>, vector<128x128xf32>
    %cst_18 = arith.constant dense<0.000000e+00> : vector<16x128xf32>
    %23 = tpu.matmul %20, %22, %cst_18 {dimension_numbers = #tpu.dot_dimension_numbers<[1], [0], [0], [1], [0, 0, 1, 1], [], []>} : vector<16x128xf32>, vector<128x128xf32>, vector<16x128xf32> -> vector<16x128xf32>
    %c0_19 = arith.constant 0 : index
    %c0_20 = arith.constant 0 : index
    %24 = vector.load %arg8[%c0_19, %c0_20] : memref<1x128xf32, #tpu.memory_space<vmem>>, vector<1x128xf32>
    %25 = vector.broadcast %24 : vector<1x128xf32> to vector<16x128xf32>
    %26 = arith.addf %23, %25 : vector<16x128xf32>
    %cst_21 = arith.constant 0.000000e+00 : f32
    %27 = vector.broadcast %cst_21 : f32 to vector<16x128xf32>
    %28 = arith.cmpf oge, %26, %27 : vector<16x128xf32>
    %cst_22 = arith.constant 2.000000e-01 : f32
    %29 = vector.broadcast %cst_22 : f32 to vector<16x128xf32>
    %30 = arith.mulf %29, %26 : vector<16x128xf32>
    %31 = arith.select %28, %26, %30 : vector<16x128xi1>, vector<16x128xf32>
    %c0_23 = arith.constant 0 : index
    %c0_24 = arith.constant 0 : index
    %32 = vector.load %arg5[%c0_23, %c0_24] : memref<128x128xf32, #tpu.memory_space<vmem>>, vector<128x128xf32>
    %cst_25 = arith.constant dense<0.000000e+00> : vector<16x128xf32>
    %33 = tpu.matmul %31, %32, %cst_25 {dimension_numbers = #tpu.dot_dimension_numbers<[1], [0], [0], [1], [0, 0, 1, 1], [], []>} : vector<16x128xf32>, vector<128x128xf32>, vector<16x128xf32> -> vector<16x128xf32>
    %c0_26 = arith.constant 0 : index
    %c0_27 = arith.constant 0 : index
    %34 = vector.load %arg9[%c0_26, %c0_27] : memref<1x128xf32, #tpu.memory_space<vmem>>, vector<1x128xf32>
    %35 = vector.broadcast %34 : vector<1x128xf32> to vector<16x128xf32>
    %36 = arith.addf %33, %35 : vector<16x128xf32>
    %cst_28 = arith.constant 0.000000e+00 : f32
    %37 = vector.broadcast %cst_28 : f32 to vector<16x128xf32>
    %38 = arith.cmpf oge, %36, %37 : vector<16x128xf32>
    %cst_29 = arith.constant 2.000000e-01 : f32
    %39 = vector.broadcast %cst_29 : f32 to vector<16x128xf32>
    %40 = arith.mulf %39, %36 : vector<16x128xf32>
    %41 = arith.select %38, %36, %40 : vector<16x128xi1>, vector<16x128xf32>
    %c0_30 = arith.constant 0 : index
    %c0_31 = arith.constant 0 : index
    %42 = vector.load %arg11[%c0_30, %c0_31] : memref<16x128xf32, #tpu.memory_space<vmem>>, vector<16x128xf32>
    tpu.vector_store %arg11[%c0_30, %c0_31], %41 {strides = array<i32>} : memref<16x128xf32, #tpu.memory_space<vmem>>, vector<16x128xf32>,
    return
  }
  func.func @transform_0(%arg0: i32) -> (i32, i32) {
    %c0_i32 = arith.constant 0 : i32
    %c0_i32_0 = arith.constant 0 : i32
    return %arg0, %c0_i32 : i32, i32
  }
  func.func @transform_1(%arg0: i32) -> (i32, i32) {
    %c0_i32 = arith.constant 0 : i32
    %c0_i32_0 = arith.constant 0 : i32
    %c0_i32_1 = arith.constant 0 : i32
    return %c0_i32, %c0_i32_0 : i32, i32
  }
  func.func @transform_2(%arg0: i32) -> (i32, i32) {
    %c0_i32 = arith.constant 0 : i32
    %c0_i32_0 = arith.constant 0 : i32
    %c0_i32_1 = arith.constant 0 : i32
    return %c0_i32, %c0_i32_0 : i32, i32
  }
  func.func @transform_3(%arg0: i32) -> (i32, i32) {
    %c0_i32 = arith.constant 0 : i32
    %c0_i32_0 = arith.constant 0 : i32
    %c0_i32_1 = arith.constant 0 : i32
    return %c0_i32, %c0_i32_0 : i32, i32
  }
  func.func @transform_4(%arg0: i32) -> (i32, i32) {
    %c0_i32 = arith.constant 0 : i32
    %c0_i32_0 = arith.constant 0 : i32
    %c0_i32_1 = arith.constant 0 : i32
    return %c0_i32, %c0_i32_0 : i32, i32
  }
  func.func @transform_5(%arg0: i32) -> (i32, i32) {
    %c0_i32 = arith.constant 0 : i32
    %c0_i32_0 = arith.constant 0 : i32
    %c0_i32_1 = arith.constant 0 : i32
    return %c0_i32, %c0_i32_0 : i32, i32
  }
  func.func @transform_6(%arg0: i32) -> (i32, i32) {
    %c0_i32 = arith.constant 0 : i32
    %c0_i32_0 = arith.constant 0 : i32
    %c0_i32_1 = arith.constant 0 : i32
    return %c0_i32, %c0_i32_0 : i32, i32
  }
  func.func @transform_7(%arg0: i32) -> (i32, i32) {
    %c0_i32 = arith.constant 0 : i32
    %c0_i32_0 = arith.constant 0 : i32
    %c0_i32_1 = arith.constant 0 : i32
    return %c0_i32, %c0_i32_0 : i32, i32
  }
  func.func @transform_8(%arg0: i32) -> (i32, i32) {
    %c0_i32 = arith.constant 0 : i32
    %c0_i32_0 = arith.constant 0 : i32
    %c0_i32_1 = arith.constant 0 : i32
    return %c0_i32, %c0_i32_0 : i32, i32
  }
  func.func @transform_9(%arg0: i32) -> (i32, i32) {
    %c0_i32 = arith.constant 0 : i32
    %c0_i32_0 = arith.constant 0 : i32
    return %arg0, %c0_i32 : i32, i32
  }
  func.func @transform_10(%arg0: i32) -> (i32, i32) {
    %c0_i32 = arith.constant 0 : i32
    %c0_i32_0 = arith.constant 0 : i32
    return %arg0, %c0_i32 : i32, i32
  }
}

</mosaic_0001>

<llo_original>
// kernel: tpu_custom_call.1
$region0: #{tpu_custom_call.1}
  #allocation0 [shape = 'u32[]', space=smem, size = 0x4, offset = 0x4, fixed_abs, tag = 'smem constant byte address 0x4 - core index']
  #allocation1 [shape = 'u32[144,128]{1,0:T(1,128)}', space=vmem, size = 0x12000, scoped, tag = 'internal scratch']
  %s0 = inlined_call_operand.hbm [shape: f32[16,128], index: 0, kind: input, shape index: {}]
  %s1 = inlined_call_operand.hbm [shape: f32[128,128], index: 1, kind: input, shape index: {}]
  %s2 = inlined_call_operand.hbm [shape: f32[128,128], index: 2, kind: input, shape index: {}]
  %s3 = inlined_call_operand.hbm [shape: f32[128,128], index: 3, kind: input, shape index: {}]
  %s4 = inlined_call_operand.hbm [shape: f32[128,128], index: 4, kind: input, shape index: {}]
  %s5 = inlined_call_operand.vmem [shape: f32[1,128], index: 5, kind: input, shape index: {}]
  %s6 = inlined_call_operand.vmem [shape: f32[1,128], index: 6, kind: input, shape index: {}]
  %s7 = inlined_call_operand.vmem [shape: f32[1,128], index: 7, kind: input, shape index: {}]
  %s8 = inlined_call_operand.vmem [shape: f32[1,128], index: 8, kind: input, shape index: {}]
  %s9 = inlined_call_operand.hbm [shape: f32[16,128], index: 9, kind: output, shape index: {0}]
  %s10 = inlined_call_operand.hbm [shape: f32[16,128], index: 10, kind: output, shape index: {1}]
  %11 = xla_tuple %s9, %s10
  %s12 = sld [smem:[#allocation0]]
  $region74: #{tpu_custom_call.1} parent=0
    _
  %s14 = ssub.s32 1, %s12
  %s15 = scalar_select 0, %s14, %s12
  $region1: #{tpu_custom_call.1} parent=0
    #allocation2 [shape = 'u8[8192]{0}', space=vmem, size = 0x2000, scoped, tag = 'input window, operand 0, single buffered']
    #allocation3 [shape = 's32[1]{0}', space=sflag, size = 0x4, scoped, tag = 'scoped memory for tpu_custom_call.1']
    #allocation4 [shape = 's32[1]{0}', space=sflag, size = 0x4, scoped, tag = 'scoped memory for tpu_custom_call.1']
    #allocation5 [shape = 'u8[65536]{0}', space=vmem, size = 0x10000, scoped, tag = 'input window, operand 1, single buffered']
    #allocation6 [shape = 's32[1]{0}', space=sflag, size = 0x4, scoped, tag = 'scoped memory for tpu_custom_call.1']
    #allocation7 [shape = 'u8[65536]{0}', space=vmem, size = 0x10000, scoped, tag = 'input window, operand 2, single buffered']
    #allocation8 [shape = 'u8[65536]{0}', space=vmem, size = 0x10000, scoped, tag = 'input window, operand 3, single buffered']
    #allocation9 [shape = 's32[1]{0}', space=sflag, size = 0x4, scoped, tag = 'scoped memory for tpu_custom_call.1']
    #allocation10 [shape = 'u8[65536]{0}', space=vmem, size = 0x10000, scoped, tag = 'input window, operand 4, single buffered']
    #allocation11 [shape = 'u8[8192]{0}', space=vmem, size = 0x2000, scoped, tag = 'output window, operand 0, single buffered']
    #allocation12 [shape = 'u8[8192]{0}', space=vmem, size = 0x2000, scoped, tag = 'output window, operand 1, single buffered']
    #allocation13 [shape = 's32[1]{0}', space=sflag, size = 0x4, scoped, tag = 'scoped memory for tpu_custom_call.1']
    %16 = vsyncpa [#allocation3], 0
    %17 = vsyncpa [#allocation6], 0
    %18 = vsyncpa [#allocation9], 0
    %19 = vsyncpa [#allocation4], 0
    %20 = vsyncpa [#allocation13], 0
    // Predicated region
    $region2: #{tpu_custom_call.1} parent=1 // pred_check
      _
    $region3: #{tpu_custom_call.1} parent=1 // pred_check_branch
      %22 = sbr.rel (0) target = $region5
    $region4: #{tpu_custom_call.1} parent=1 // pred_region
      %s24 = ssub.s32 256, 256
      %25 = vsyncadd [#allocation3], %s24
      %s26 = sshll.u32 [#allocation2], 4
      %s27 = int_to_ptr.vmem [resolvable:$true] %s26
      %32 = dma.hbm_to_vmem [thread:$0]  %s0, 256, %s27, [#allocation3], 128, 128, 8
    $region5: #{tpu_custom_call.1} parent=1 // pred_fallthru
      _
    // Predicated region
    $region6: #{tpu_custom_call.1} parent=1 // pred_check
      _
    $region7: #{tpu_custom_call.1} parent=1 // pred_check_branch
      %34 = sbr.rel (0) target = $region9
    $region8: #{tpu_custom_call.1} parent=1 // pred_region
      %s36 = ssub.s32 2048, 2048
      %37 = vsyncadd [#allocation6], %s36
      %s38 = sshll.u32 [#allocation5], 4
      %s39 = int_to_ptr.vmem [resolvable:$true] %s38
      %44 = dma.hbm_to_vmem [thread:$0]  %s1, 2048, %s39, [#allocation6], 128, 128, 8
    $region9: #{tpu_custom_call.1} parent=1 // pred_fallthru
      _
    // Predicated region
    $region10: #{tpu_custom_call.1} parent=1 // pred_check
      _
    $region11: #{tpu_custom_call.1} parent=1 // pred_check_branch
      %46 = sbr.rel (0) target = $region13
    $region12: #{tpu_custom_call.1} parent=1 // pred_region
      %s48 = ssub.s32 2048, 2048
      %49 = vsyncadd [#allocation6], %s48
      %s50 = sshll.u32 [#allocation7], 4
      %s51 = int_to_ptr.vmem [resolvable:$true] %s50
      %56 = dma.hbm_to_vmem [thread:$0]  %s2, 2048, %s51, [#allocation6], 128, 128, 8
    $region13: #{tpu_custom_call.1} parent=1 // pred_fallthru
      _
    // Predicated region
    $region14: #{tpu_custom_call.1} parent=1 // pred_check
      _
    $region15: #{tpu_custom_call.1} parent=1 // pred_check_branch
      %58 = sbr.rel (0) target = $region17
    $region16: #{tpu_custom_call.1} parent=1 // pred_region
      %s60 = ssub.s32 2048, 2048
      %61 = vsyncadd [#allocation9], %s60
      %s62 = sshll.u32 [#allocation8], 4
      %s63 = int_to_ptr.vmem [resolvable:$true] %s62
      %68 = dma.hbm_to_vmem [thread:$0]  %s3, 2048, %s63, [#allocation9], 128, 128, 8
    $region17: #{tpu_custom_call.1} parent=1 // pred_fallthru
      _
    // Predicated region
    $region18: #{tpu_custom_call.1} parent=1 // pred_check
      _
    $region19: #{tpu_custom_call.1} parent=1 // pred_check_branch
      %70 = sbr.rel (0) target = $region21
    $region20: #{tpu_custom_call.1} parent=1 // pred_region
      %s72 = ssub.s32 2048, 2048
      %73 = vsyncadd [#allocation9], %s72
      %s74 = sshll.u32 [#allocation10], 4
      %s75 = int_to_ptr.vmem [resolvable:$true] %s74
      %80 = dma.hbm_to_vmem [thread:$0]  %s4, 2048, %s75, [#allocation9], 128, 128, 8
    $region21: #{tpu_custom_call.1} parent=1 // pred_fallthru
      _
    // Predicated region
    $region22: #{tpu_custom_call.1} parent=1 // pred_check
      _
    $region23: #{tpu_custom_call.1} parent=1 // pred_check_branch
      %82 = sbr.rel (0) target = $region25
    $region24: #{tpu_custom_call.1} parent=1 // pred_region
      _
    $region25: #{tpu_custom_call.1} parent=1 // pred_fallthru
      _
    // Predicated region
    $region26: #{tpu_custom_call.1} parent=1 // pred_check
      _
    $region27: #{tpu_custom_call.1} parent=1 // pred_check_branch
      %84 = sbr.rel (0) target = $region29
    $region28: #{tpu_custom_call.1} parent=1 // pred_region
      _
    $region29: #{tpu_custom_call.1} parent=1 // pred_fallthru
      _
    // Predicated region
    $region30: #{tpu_custom_call.1} parent=1 // pred_check
      _
    $region31: #{tpu_custom_call.1} parent=1 // pred_check_branch
      %86 = sbr.rel (0) target = $region33
    $region32: #{tpu_custom_call.1} parent=1 // pred_region
      _
    $region33: #{tpu_custom_call.1} parent=1 // pred_fallthru
      _
    // Predicated region
    $region34: #{tpu_custom_call.1} parent=1 // pred_check
      _
    $region35: #{tpu_custom_call.1} parent=1 // pred_check_branch
      %88 = sbr.rel (0) target = $region37
    $region36: #{tpu_custom_call.1} parent=1 // pred_region
      _
    $region37: #{tpu_custom_call.1} parent=1 // pred_fallthru
      _
    // Predicated region
    $region38: #{tpu_custom_call.1} parent=1 // pred_check
      _
    $region39: #{tpu_custom_call.1} parent=1 // pred_check_branch
      %90 = sbr.rel (0) target = $region41
    $region40: #{tpu_custom_call.1} parent=1 // pred_region
      %91 = dma.done [#allocation3], 256
    $region41: #{tpu_custom_call.1} parent=1 // pred_fallthru
      _
    // Predicated region
    $region42: #{tpu_custom_call.1} parent=1 // pred_check
      _
    $region43: #{tpu_custom_call.1} parent=1 // pred_check_branch
      %93 = sbr.rel (0) target = $region45
    $region44: #{tpu_custom_call.1} parent=1 // pred_region
      %94 = dma.done [#allocation6], 2048
    $region45: #{tpu_custom_call.1} parent=1 // pred_fallthru
      _
    // Predicated region
    $region46: #{tpu_custom_call.1} parent=1 // pred_check
      _
    $region47: #{tpu_custom_call.1} parent=1 // pred_check_branch
      %96 = sbr.rel (0) target = $region49
    $region48: #{tpu_custom_call.1} parent=1 // pred_region
      %97 = dma.done [#allocation6], 2048
    $region49: #{tpu_custom_call.1} parent=1 // pred_fallthru
      _
    // Predicated region
    $region50: #{tpu_custom_call.1} parent=1 // pred_check
      _
    $region51: #{tpu_custom_call.1} parent=1 // pred_check_branch
      %99 = sbr.rel (0) target = $region53
    $region52: #{tpu_custom_call.1} parent=1 // pred_region
      %100 = dma.done [#allocation9], 2048
    $region53: #{tpu_custom_call.1} parent=1 // pred_fallthru
      _
    // Predicated region
    $region54: #{tpu_custom_call.1} parent=1 // pred_check
      _
    $region55: #{tpu_custom_call.1} parent=1 // pred_check_branch
      %102 = sbr.rel (0) target = $region57
    $region56: #{tpu_custom_call.1} parent=1 // pred_region
      %103 = dma.done [#allocation9], 2048
    $region57: #{tpu_custom_call.1} parent=1 // pred_fallthru
      _
    %v104 = vld [vmem:[#allocation2] sm:$0xff]
    %v105 = vld [vmem:[#allocation2 + $0x8] sm:$0xff]
    %v106 = vld [vmem:[#allocation5] sm:$0xff]
    %v107 = vld [vmem:[#allocation5 + $0x8] sm:$0xff]
    %v108 = vld [vmem:[#allocation5 + $0x10] sm:$0xff]
    %v109 = vld [vmem:[#allocation5 + $0x18] sm:$0xff]
    %v110 = vld [vmem:[#allocation5 + $0x20] sm:$0xff]
    %v111 = vld [vmem:[#allocation5 + $0x28] sm:$0xff]
    %v112 = vld [vmem:[#allocation5 + $0x30] sm:$0xff]
    %v113 = vld [vmem:[#allocation5 + $0x38] sm:$0xff]
    %v114 = vld [vmem:[#allocation5 + $0x40] sm:$0xff]
    %v115 = vld [vmem:[#allocation5 + $0x48] sm:$0xff]
    %v116 = vld [vmem:[#allocation5 + $0x50] sm:$0xff]
    %v117 = vld [vmem:[#allocation5 + $0x58] sm:$0xff]
    %v118 = vld [vmem:[#allocation5 + $0x60] sm:$0xff]
    %v119 = vld [vmem:[#allocation5 + $0x68] sm:$0xff]
    %v120 = vld [vmem:[#allocation5 + $0x70] sm:$0xff]
    %v121 = vld [vmem:[#allocation5 + $0x78] sm:$0xff]
    %v122 = vld [vmem:[%s5] sm:$0x1]
    %v124 = vlaneseq
    %v125 = vshrl.u32 %v124, 7
    %v126 = vsub.s32 0, %v125
    %v127 = vrot.slane %v122, %v126
    %129 = vmatprep.subr.mxu0 0.0
    %130 = vmatpush1.msra.mxu0 %v106
    %131 = vmatprep.subr.mxu0 0.0
    %132 = vmatpush1.msra.mxu0 %v107
    %133 = vmatprep.subr.mxu0 0.0
    %134 = vmatpush1.msra.mxu0 %v108
    %135 = vmatprep.subr.mxu0 0.0
    %136 = vmatpush1.msra.mxu0 %v109
    %137 = vmatprep.subr.mxu0 0.0
    %138 = vmatpush1.msra.mxu0 %v110
    %139 = vmatprep.subr.mxu0 0.0
    %140 = vmatpush1.msra.mxu0 %v111
    %141 = vmatprep.subr.mxu0 0.0
    %142 = vmatpush1.msra.mxu0 %v112
    %143 = vmatprep.subr.mxu0 0.0
    %144 = vmatpush1.msra.mxu0 %v113
    %145 = vmatprep.subr.mxu0 0.0
    %146 = vmatpush1.msra.mxu0 %v114
    %147 = vmatprep.subr.mxu0 0.0
    %148 = vmatpush1.msra.mxu0 %v115
    %149 = vmatprep.subr.mxu0 0.0
    %150 = vmatpush1.msra.mxu0 %v116
    %151 = vmatprep.subr.mxu0 0.0
    %152 = vmatpush1.msra.mxu0 %v117
    %153 = vmatprep.subr.mxu0 0.0
    %154 = vmatpush1.msra.mxu0 %v118
    %155 = vmatprep.subr.mxu0 0.0
    %156 = vmatpush1.msra.mxu0 %v119
    %157 = vmatprep.subr.mxu0 0.0
    %158 = vmatpush1.msra.mxu0 %v120
    %159 = vmatprep.subr.mxu0 0.0
    %160 = vmatpush1.msra.mxu0 %v121
    %161 = vmatprep.subr.mxu0 0.0
    %162 = vmatpush1.msra.mxu0 0.0
    %163 = vmatprep.subr.mxu0 0.0
    %164 = vmatpush1.msra.mxu0 0.0
    %165 = vmatprep.subr.mxu0 0.0
    %166 = vmatpush1.msra.mxu0 0.0
    %167 = vmatprep.subr.mxu0 0.0
    %168 = vmatpush1.msra.mxu0 0.0
    %169 = vmatprep.subr.mxu0 0.0
    %170 = vmatpush1.msra.mxu0 0.0
    %171 = vmatprep.subr.mxu0 0.0
    %172 = vmatpush1.msra.mxu0 0.0
    %173 = vmatprep.subr.mxu0 0.0
    %174 = vmatpush1.msra.mxu0 0.0
    %175 = vmatprep.subr.mxu0 0.0
    %176 = vmatpush1.msra.mxu0 0.0
    %177 = vmatprep.subr.mxu0 0.0
    %178 = vmatpush1.msra.mxu0 0.0
    %179 = vmatprep.subr.mxu0 0.0
    %180 = vmatpush1.msra.mxu0 0.0
    %181 = vmatprep.subr.mxu0 0.0
    %182 = vmatpush1.msra.mxu0 0.0
    %183 = vmatprep.subr.mxu0 0.0
    %184 = vmatpush1.msra.mxu0 0.0
    %185 = vmatprep.subr.mxu0 0.0
    %186 = vmatpush1.msra.mxu0 0.0
    %187 = vmatprep.subr.mxu0 0.0
    %188 = vmatpush1.msra.mxu0 0.0
    %189 = vmatprep.subr.mxu0 0.0
    %190 = vmatpush1.msra.mxu0 0.0
    %191 = vmatprep.subr.mxu0 0.0
    %192 = vmatpush1.msra.mxu0 0.0
    %193 = vmatprep.mubr.f32.mxu0 0.0
    %194 = vmatmul.mubr.f32.gmra.mrb[0].mxu0 %v104
    %v195 = vpop.f32.mrb[0].mxu0
    %v196 = vadd.f32 %v127, %v195
    %v197 = vpop.f32.mrb[0].mxu0
    %198 = vmatprep.mubr.f32.mxu0 0.0
    %199 = vmatmul.mubr.f32.gmra.mrb[0].mxu0 %v105
    %v200 = vpop.f32.mrb[0].mxu0
    %v201 = vadd.f32 %v127, %v200
    %v202 = vpop.f32.mrb[0].mxu0
    %203 = vdwg.mxu0
    %vm204 = vcmp.ge.f32.partialorder %v196, 0.0
    %vm205 = vcmp.ge.f32.partialorder %v201, 0.0
    %v206 = vmul.f32 %v196, 0.2
    %v207 = vmul.f32 %v201, 0.2
    %v208 = vsel %vm204, %v196, %v206
    %v209 = vsel %vm205, %v201, %v207
    %v210 = vld [vmem:[#allocation7] sm:$0xff]
    %v211 = vld [vmem:[#allocation7 + $0x8] sm:$0xff]
    %v212 = vld [vmem:[#allocation7 + $0x10] sm:$0xff]
    %v213 = vld [vmem:[#allocation7 + $0x18] sm:$0xff]
    %v214 = vld [vmem:[#allocation7 + $0x20] sm:$0xff]
    %v215 = vld [vmem:[#allocation7 + $0x28] sm:$0xff]
    %v216 = vld [vmem:[#allocation7 + $0x30] sm:$0xff]
    %v217 = vld [vmem:[#allocation7 + $0x38] sm:$0xff]
    %v218 = vld [vmem:[#allocation7 + $0x40] sm:$0xff]
    %v219 = vld [vmem:[#allocation7 + $0x48] sm:$0xff]
    %v220 = vld [vmem:[#allocation7 + $0x50] sm:$0xff]
    %v221 = vld [vmem:[#allocation7 + $0x58] sm:$0xff]
    %v222 = vld [vmem:[#allocation7 + $0x60] sm:$0xff]
    %v223 = vld [vmem:[#allocation7 + $0x68] sm:$0xff]
    %v224 = vld [vmem:[#allocation7 + $0x70] sm:$0xff]
    %v225 = vld [vmem:[#allocation7 + $0x78] sm:$0xff]
    %v226 = vld [vmem:[%s6] sm:$0x1]
    %v228 = vlaneseq
    %v229 = vshrl.u32 %v228, 7
    %v230 = vsub.s32 0, %v229
    %v231 = vrot.slane %v226, %v230
    %233 = vmatprep.subr.mxu0 0.0
    %234 = vmatpush1.msra.mxu0 %v210
    %235 = vmatprep.subr.mxu0 0.0
    %236 = vmatpush1.msra.mxu0 %v211
    %237 = vmatprep.subr.mxu0 0.0
    %238 = vmatpush1.msra.mxu0 %v212
    %239 = vmatprep.subr.mxu0 0.0
    %240 = vmatpush1.msra.mxu0 %v213
    %241 = vmatprep.subr.mxu0 0.0
    %242 = vmatpush1.msra.mxu0 %v214
    %243 = vmatprep.subr.mxu0 0.0
    %244 = vmatpush1.msra.mxu0 %v215
    %245 = vmatprep.subr.mxu0 0.0
    %246 = vmatpush1.msra.mxu0 %v216
    %247 = vmatprep.subr.mxu0 0.0
    %248 = vmatpush1.msra.mxu0 %v217
    %249 = vmatprep.subr.mxu0 0.0
    %250 = vmatpush1.msra.mxu0 %v218
    %251 = vmatprep.subr.mxu0 0.0
    %252 = vmatpush1.msra.mxu0 %v219
    %253 = vmatprep.subr.mxu0 0.0
    %254 = vmatpush1.msra.mxu0 %v220
    %255 = vmatprep.subr.mxu0 0.0
    %256 = vmatpush1.msra.mxu0 %v221
    %257 = vmatprep.subr.mxu0 0.0
    %258 = vmatpush1.msra.mxu0 %v222
    %259 = vmatprep.subr.mxu0 0.0
    %260 = vmatpush1.msra.mxu0 %v223
    %261 = vmatprep.subr.mxu0 0.0
    %262 = vmatpush1.msra.mxu0 %v224
    %263 = vmatprep.subr.mxu0 0.0
    %264 = vmatpush1.msra.mxu0 %v225
    %265 = vmatprep.subr.mxu0 0.0
    %266 = vmatpush1.msra.mxu0 0.0
    %267 = vmatprep.subr.mxu0 0.0
    %268 = vmatpush1.msra.mxu0 0.0
    %269 = vmatprep.subr.mxu0 0.0
    %270 = vmatpush1.msra.mxu0 0.0
    %271 = vmatprep.subr.mxu0 0.0
    %272 = vmatpush1.msra.mxu0 0.0
    %273 = vmatprep.subr.mxu0 0.0
    %274 = vmatpush1.msra.mxu0 0.0
    %275 = vmatprep.subr.mxu0 0.0
    %276 = vmatpush1.msra.mxu0 0.0
    %277 = vmatprep.subr.mxu0 0.0
    %278 = vmatpush1.msra.mxu0 0.0
    %279 = vmatprep.subr.mxu0 0.0
    %280 = vmatpush1.msra.mxu0 0.0
    %281 = vmatprep.subr.mxu0 0.0
    %282 = vmatpush1.msra.mxu0 0.0
    %283 = vmatprep.subr.mxu0 0.0
    %284 = vmatpush1.msra.mxu0 0.0
    %285 = vmatprep.subr.mxu0 0.0
    %286 = vmatpush1.msra.mxu0 0.0
    %287 = vmatprep.subr.mxu0 0.0
    %288 = vmatpush1.msra.mxu0 0.0
    %289 = vmatprep.subr.mxu0 0.0
    %290 = vmatpush1.msra.mxu0 0.0
    %291 = vmatprep.subr.mxu0 0.0
    %292 = vmatpush1.msra.mxu0 0.0
    %293 = vmatprep.subr.mxu0 0.0
    %294 = vmatpush1.msra.mxu0 0.0
    %295 = vmatprep.subr.mxu0 0.0
    %296 = vmatpush1.msra.mxu0 0.0
    %297 = vmatprep.mubr.f32.mxu0 0.0
    %298 = vmatmul.mubr.f32.gmra.mrb[0].mxu0 %v208
    %v299 = vpop.f32.mrb[0].mxu0
    %v300 = vadd.f32 %v231, %v299
    %v301 = vpop.f32.mrb[0].mxu0
    %302 = vmatprep.mubr.f32.mxu0 0.0
    %303 = vmatmul.mubr.f32.gmra.mrb[0].mxu0 %v209
    %v304 = vpop.f32.mrb[0].mxu0
    %v305 = vadd.f32 %v231, %v304
    %v306 = vpop.f32.mrb[0].mxu0
    %307 = vdwg.mxu0
    %vm308 = vcmp.ge.f32.partialorder %v300, 0.0
    %vm309 = vcmp.ge.f32.partialorder %v305, 0.0
    %v310 = vmul.f32 %v300, 0.2
    %v311 = vmul.f32 %v305, 0.2
    %v312 = vsel %vm308, %v300, %v310
    %v313 = vsel %vm309, %v305, %v311
    %314 = vst [vmem:[#allocation11] sm:$0xff] %v312
    %315 = vst [vmem:[#allocation11 + $0x8] sm:$0xff] %v313
    %v316 = vld [vmem:[#allocation8] sm:$0xff]
    %v317 = vld [vmem:[#allocation8 + $0x8] sm:$0xff]
    %v318 = vld [vmem:[#allocation8 + $0x10] sm:$0xff]
    %v319 = vld [vmem:[#allocation8 + $0x18] sm:$0xff]
    %v320 = vld [vmem:[#allocation8 + $0x20] sm:$0xff]
    %v321 = vld [vmem:[#allocation8 + $0x28] sm:$0xff]
    %v322 = vld [vmem:[#allocation8 + $0x30] sm:$0xff]
    %v323 = vld [vmem:[#allocation8 + $0x38] sm:$0xff]
    %v324 = vld [vmem:[#allocation8 + $0x40] sm:$0xff]
    %v325 = vld [vmem:[#allocation8 + $0x48] sm:$0xff]
    %v326 = vld [vmem:[#allocation8 + $0x50] sm:$0xff]
    %v327 = vld [vmem:[#allocation8 + $0x58] sm:$0xff]
    %v328 = vld [vmem:[#allocation8 + $0x60] sm:$0xff]
    %v329 = vld [vmem:[#allocation8 + $0x68] sm:$0xff]
    %v330 = vld [vmem:[#allocation8 + $0x70] sm:$0xff]
    %v331 = vld [vmem:[#allocation8 + $0x78] sm:$0xff]
    %v332 = vld [vmem:[%s7] sm:$0x1]
    %v334 = vlaneseq
    %v335 = vshrl.u32 %v334, 7
    %v336 = vsub.s32 0, %v335
    %v337 = vrot.slane %v332, %v336
    %339 = vmatprep.subr.mxu0 0.0
    %340 = vmatpush1.msra.mxu0 %v316
    %341 = vmatprep.subr.mxu0 0.0
    %342 = vmatpush1.msra.mxu0 %v317
    %343 = vmatprep.subr.mxu0 0.0
    %344 = vmatpush1.msra.mxu0 %v318
    %345 = vmatprep.subr.mxu0 0.0
    %346 = vmatpush1.msra.mxu0 %v319
    %347 = vmatprep.subr.mxu0 0.0
    %348 = vmatpush1.msra.mxu0 %v320
    %349 = vmatprep.subr.mxu0 0.0
    %350 = vmatpush1.msra.mxu0 %v321
    %351 = vmatprep.subr.mxu0 0.0
    %352 = vmatpush1.msra.mxu0 %v322
    %353 = vmatprep.subr.mxu0 0.0
    %354 = vmatpush1.msra.mxu0 %v323
    %355 = vmatprep.subr.mxu0 0.0
    %356 = vmatpush1.msra.mxu0 %v324
    %357 = vmatprep.subr.mxu0 0.0
    %358 = vmatpush1.msra.mxu0 %v325
    %359 = vmatprep.subr.mxu0 0.0
    %360 = vmatpush1.msra.mxu0 %v326
    %361 = vmatprep.subr.mxu0 0.0
    %362 = vmatpush1.msra.mxu0 %v327
    %363 = vmatprep.subr.mxu0 0.0
    %364 = vmatpush1.msra.mxu0 %v328
    %365 = vmatprep.subr.mxu0 0.0
    %366 = vmatpush1.msra.mxu0 %v329
    %367 = vmatprep.subr.mxu0 0.0
    %368 = vmatpush1.msra.mxu0 %v330
    %369 = vmatprep.subr.mxu0 0.0
    %370 = vmatpush1.msra.mxu0 %v331
    %371 = vmatprep.subr.mxu0 0.0
    %372 = vmatpush1.msra.mxu0 0.0
    %373 = vmatprep.subr.mxu0 0.0
    %374 = vmatpush1.msra.mxu0 0.0
    %375 = vmatprep.subr.mxu0 0.0
    %376 = vmatpush1.msra.mxu0 0.0
    %377 = vmatprep.subr.mxu0 0.0
    %378 = vmatpush1.msra.mxu0 0.0
    %379 = vmatprep.subr.mxu0 0.0
    %380 = vmatpush1.msra.mxu0 0.0
    %381 = vmatprep.subr.mxu0 0.0
    %382 = vmatpush1.msra.mxu0 0.0
    %383 = vmatprep.subr.mxu0 0.0
    %384 = vmatpush1.msra.mxu0 0.0
    %385 = vmatprep.subr.mxu0 0.0
    %386 = vmatpush1.msra.mxu0 0.0
    %387 = vmatprep.subr.mxu0 0.0
    %388 = vmatpush1.msra.mxu0 0.0
    %389 = vmatprep.subr.mxu0 0.0
    %390 = vmatpush1.msra.mxu0 0.0
    %391 = vmatprep.subr.mxu0 0.0
    %392 = vmatpush1.msra.mxu0 0.0
    %393 = vmatprep.subr.mxu0 0.0
    %394 = vmatpush1.msra.mxu0 0.0
    %395 = vmatprep.subr.mxu0 0.0
    %396 = vmatpush1.msra.mxu0 0.0
    %397 = vmatprep.subr.mxu0 0.0
    %398 = vmatpush1.msra.mxu0 0.0
    %399 = vmatprep.subr.mxu0 0.0
    %400 = vmatpush1.msra.mxu0 0.0
    %401 = vmatprep.subr.mxu0 0.0
    %402 = vmatpush1.msra.mxu0 0.0
    %403 = vmatprep.mubr.f32.mxu0 0.0
    %404 = vmatmul.mubr.f32.gmra.mrb[0].mxu0 %v312
    %v405 = vpop.f32.mrb[0].mxu0
    %v406 = vadd.f32 %v337, %v405
    %v407 = vpop.f32.mrb[0].mxu0
    %408 = vmatprep.mubr.f32.mxu0 0.0
    %409 = vmatmul.mubr.f32.gmra.mrb[0].mxu0 %v313
    %v410 = vpop.f32.mrb[0].mxu0
    %v411 = vadd.f32 %v337, %v410
    %v412 = vpop.f32.mrb[0].mxu0
    %413 = vdwg.mxu0
    %vm414 = vcmp.ge.f32.partialorder %v406, 0.0
    %vm415 = vcmp.ge.f32.partialorder %v411, 0.0
    %v416 = vmul.f32 %v406, 0.2
    %v417 = vmul.f32 %v411, 0.2
    %v418 = vsel %vm414, %v406, %v416
    %v419 = vsel %vm415, %v411, %v417
    %v420 = vld [vmem:[#allocation10] sm:$0xff]
    %v421 = vld [vmem:[#allocation10 + $0x8] sm:$0xff]
    %v422 = vld [vmem:[#allocation10 + $0x10] sm:$0xff]
    %v423 = vld [vmem:[#allocation10 + $0x18] sm:$0xff]
    %v424 = vld [vmem:[#allocation10 + $0x20] sm:$0xff]
    %v425 = vld [vmem:[#allocation10 + $0x28] sm:$0xff]
    %v426 = vld [vmem:[#allocation10 + $0x30] sm:$0xff]
    %v427 = vld [vmem:[#allocation10 + $0x38] sm:$0xff]
    %v428 = vld [vmem:[#allocation10 + $0x40] sm:$0xff]
    %v429 = vld [vmem:[#allocation10 + $0x48] sm:$0xff]
    %v430 = vld [vmem:[#allocation10 + $0x50] sm:$0xff]
    %v431 = vld [vmem:[#allocation10 + $0x58] sm:$0xff]
    %v432 = vld [vmem:[#allocation10 + $0x60] sm:$0xff]
    %v433 = vld [vmem:[#allocation10 + $0x68] sm:$0xff]
    %v434 = vld [vmem:[#allocation10 + $0x70] sm:$0xff]
    %v435 = vld [vmem:[#allocation10 + $0x78] sm:$0xff]
    %v436 = vld [vmem:[%s8] sm:$0x1]
    %v438 = vlaneseq
    %v439 = vshrl.u32 %v438, 7
    %v440 = vsub.s32 0, %v439
    %v441 = vrot.slane %v436, %v440
    %443 = vmatprep.subr.mxu0 0.0
    %444 = vmatpush1.msra.mxu0 %v420
    %445 = vmatprep.subr.mxu0 0.0
    %446 = vmatpush1.msra.mxu0 %v421
    %447 = vmatprep.subr.mxu0 0.0
    %448 = vmatpush1.msra.mxu0 %v422
    %449 = vmatprep.subr.mxu0 0.0
    %450 = vmatpush1.msra.mxu0 %v423
    %451 = vmatprep.subr.mxu0 0.0
    %452 = vmatpush1.msra.mxu0 %v424
    %453 = vmatprep.subr.mxu0 0.0
    %454 = vmatpush1.msra.mxu0 %v425
    %455 = vmatprep.subr.mxu0 0.0
    %456 = vmatpush1.msra.mxu0 %v426
    %457 = vmatprep.subr.mxu0 0.0
    %458 = vmatpush1.msra.mxu0 %v427
    %459 = vmatprep.subr.mxu0 0.0
    %460 = vmatpush1.msra.mxu0 %v428
    %461 = vmatprep.subr.mxu0 0.0
    %462 = vmatpush1.msra.mxu0 %v429
    %463 = vmatprep.subr.mxu0 0.0
    %464 = vmatpush1.msra.mxu0 %v430
    %465 = vmatprep.subr.mxu0 0.0
    %466 = vmatpush1.msra.mxu0 %v431
    %467 = vmatprep.subr.mxu0 0.0
    %468 = vmatpush1.msra.mxu0 %v432
    %469 = vmatprep.subr.mxu0 0.0
    %470 = vmatpush1.msra.mxu0 %v433
    %471 = vmatprep.subr.mxu0 0.0
    %472 = vmatpush1.msra.mxu0 %v434
    %473 = vmatprep.subr.mxu0 0.0
    %474 = vmatpush1.msra.mxu0 %v435
    %475 = vmatprep.subr.mxu0 0.0
    %476 = vmatpush1.msra.mxu0 0.0
    %477 = vmatprep.subr.mxu0 0.0
    %478 = vmatpush1.msra.mxu0 0.0
    %479 = vmatprep.subr.mxu0 0.0
    %480 = vmatpush1.msra.mxu0 0.0
    %481 = vmatprep.subr.mxu0 0.0
    %482 = vmatpush1.msra.mxu0 0.0
    %483 = vmatprep.subr.mxu0 0.0
    %484 = vmatpush1.msra.mxu0 0.0
    %485 = vmatprep.subr.mxu0 0.0
    %486 = vmatpush1.msra.mxu0 0.0
    %487 = vmatprep.subr.mxu0 0.0
    %488 = vmatpush1.msra.mxu0 0.0
    %489 = vmatprep.subr.mxu0 0.0
    %490 = vmatpush1.msra.mxu0 0.0
    %491 = vmatprep.subr.mxu0 0.0
    %492 = vmatpush1.msra.mxu0 0.0
    %493 = vmatprep.subr.mxu0 0.0
    %494 = vmatpush1.msra.mxu0 0.0
    %495 = vmatprep.subr.mxu0 0.0
    %496 = vmatpush1.msra.mxu0 0.0
    %497 = vmatprep.subr.mxu0 0.0
    %498 = vmatpush1.msra.mxu0 0.0
    %499 = vmatprep.subr.mxu0 0.0
    %500 = vmatpush1.msra.mxu0 0.0
    %501 = vmatprep.subr.mxu0 0.0
    %502 = vmatpush1.msra.mxu0 0.0
    %503 = vmatprep.subr.mxu0 0.0
    %504 = vmatpush1.msra.mxu0 0.0
    %505 = vmatprep.subr.mxu0 0.0
    %506 = vmatpush1.msra.mxu0 0.0
    %507 = vmatprep.mubr.f32.mxu0 0.0
    %508 = vmatmul.mubr.f32.gmra.mrb[0].mxu0 %v418
    %v509 = vpop.f32.mrb[0].mxu0
    %v510 = vadd.f32 %v441, %v509
    %v511 = vpop.f32.mrb[0].mxu0
    %512 = vmatprep.mubr.f32.mxu0 0.0
    %513 = vmatmul.mubr.f32.gmra.mrb[0].mxu0 %v419
    %v514 = vpop.f32.mrb[0].mxu0
    %v515 = vadd.f32 %v441, %v514
    %v516 = vpop.f32.mrb[0].mxu0
    %517 = vdwg.mxu0
    %vm518 = vcmp.ge.f32.partialorder %v510, 0.0
    %vm519 = vcmp.ge.f32.partialorder %v515, 0.0
    %v520 = vmul.f32 %v510, 0.2
    %v521 = vmul.f32 %v515, 0.2
    %v522 = vsel %vm518, %v510, %v520
    %v523 = vsel %vm519, %v515, %v521
    %524 = vst [vmem:[#allocation12] sm:$0xff] %v522
    %525 = vst [vmem:[#allocation12 + $0x8] sm:$0xff] %v523
    // Predicated region
    $region58: #{tpu_custom_call.1} parent=1 // pred_check
      _
    $region59: #{tpu_custom_call.1} parent=1 // pred_check_branch
      %527 = sbr.rel (0) target = $region61
    $region60: #{tpu_custom_call.1} parent=1 // pred_region
      %s529 = ssub.s32 256, 256
      %530 = vsyncadd [#allocation4], %s529
      %s531 = sshll.u32 [#allocation11], 4
      %s532 = int_to_ptr.vmem [resolvable:$true] %s531
      %537 = dma.vmem_to_hbm [thread:$0]  %s532, 256, %s9, [#allocation4], 128, 128, 8
    $region61: #{tpu_custom_call.1} parent=1 // pred_fallthru
      _
    // Predicated region
    $region62: #{tpu_custom_call.1} parent=1 // pred_check
      _
    $region63: #{tpu_custom_call.1} parent=1 // pred_check_branch
      %539 = sbr.rel (0) target = $region65
    $region64: #{tpu_custom_call.1} parent=1 // pred_region
      %s541 = ssub.s32 256, 256
      %542 = vsyncadd [#allocation13], %s541
      %s543 = sshll.u32 [#allocation12], 4
      %s544 = int_to_ptr.vmem [resolvable:$true] %s543
      %549 = dma.vmem_to_hbm [thread:$0]  %s544, 256, %s10, [#allocation13], 128, 128, 8
    $region65: #{tpu_custom_call.1} parent=1 // pred_fallthru
      _
    // Predicated region
    $region66: #{tpu_custom_call.1} parent=1 // pred_check
      _
    $region67: #{tpu_custom_call.1} parent=1 // pred_check_branch
      %551 = sbr.rel (0) target = $region69
    $region68: #{tpu_custom_call.1} parent=1 // pred_region
      %552 = dma.done [#allocation4], 256
    $region69: #{tpu_custom_call.1} parent=1 // pred_fallthru
      _
    // Predicated region
    $region70: #{tpu_custom_call.1} parent=1 // pred_check
      _
    $region71: #{tpu_custom_call.1} parent=1 // pred_check_branch
      %554 = sbr.rel (0) target = $region73
    $region72: #{tpu_custom_call.1} parent=1 // pred_region
      %555 = dma.done [#allocation13], 256
    $region73: #{tpu_custom_call.1} parent=1 // pred_fallthru
      _
    %556 = vsyncpa [#allocation3], 1
    %557 = vsyncpa [#allocation6], 1
    %558 = vsyncpa [#allocation9], 1
    %559 = vsyncpa [#allocation4], 1
    %560 = vsyncpa [#allocation13], 1

</llo_original>
